<compile_context>
chip_gen: v5e
topology: v5e:2x2
jax: 0.10.0
libtpu: 0.0.40
codegen_flags: <defaults>
</compile_context>

<pallas_src>
import math
import functools

import jax
import jax.numpy as jnp
from jax.experimental import pallas as pl
from jax.experimental.pallas import tpu as pltpu


# ----------------------------------------------------------------------------
# helpers
# ----------------------------------------------------------------------------
def _tile(dim: int, pref: int, quantum: int) -> int:
    """Largest divisor of `dim` that is a multiple of `quantum` and <= pref;
    full dim if dim <= pref (always legal)."""
    if dim <= pref:
        return dim
    best = None
    t = quantum
    while t <= pref:
        if dim % t == 0:
            best = t
        t += quantum
    return best if best is not None else dim


# ----------------------------------------------------------------------------
# Pallas kernel 1: tiled matmul  (x [M,K] @ wt [K,N] -> f32 [M,N])
#   f32 output block is resident across the k axis -> accumulate in place,
#   no scratch (frees VMEM for larger bm/bn).
# ----------------------------------------------------------------------------
def _matmul_kernel(x_ref, w_ref, o_ref):
    @pl.when(pl.program_id(2) == 0)
    def _():
        o_ref[...] = jnp.zeros_like(o_ref)

    o_ref[...] += jnp.dot(x_ref[...], w_ref[...],
                          preferred_element_type=jnp.float32)


def matmul(x: jax.Array, wt: jax.Array) -> jax.Array:
    """x: [M, K], wt: [K, N] (weights pre-transposed, [in, out])."""
    M, K = x.shape
    K2, N = wt.shape
    assert K == K2
    bm = _tile(M, 512, 8)
    bn = _tile(N, 512, 128)
    bk = _tile(K, 512, 128)
    grid = (M // bm, N // bn, K // bk)
    return pl.pallas_call(
        _matmul_kernel,
        out_shape=jax.ShapeDtypeStruct((M, N), jnp.float32),
        grid_spec=pltpu.PrefetchScalarGridSpec(
            num_scalar_prefetch=0,
            grid=grid,
            in_specs=[
                pl.BlockSpec((bm, bk), lambda i, j, k: (i, k)),
                pl.BlockSpec((bk, bn), lambda i, j, k: (k, j)),
            ],
            out_specs=pl.BlockSpec((bm, bn), lambda i, j, k: (i, j)),
        ),
        compiler_params=pltpu.CompilerParams(
            dimension_semantics=("parallel", "parallel", "arbitrary")),
    )(x, wt)


# ----------------------------------------------------------------------------
# Pallas kernel 2: RMSNorm fused into a consumer matmul:  rmsnorm(x) @ W
# ----------------------------------------------------------------------------
def _rmsnorm_matmul_kernel(x_ref, g_ref, w_ref, o_ref, *, eps: float):
    x = x_ref[...]
    ms = jnp.mean(x * x, axis=-1, keepdims=True)
    xn = (x * jax.lax.rsqrt(ms + eps)) * g_ref[...]
    o_ref[...] = jnp.dot(xn, w_ref[...],
                         preferred_element_type=jnp.float32).astype(o_ref.dtype)


def rmsnorm_matmul(x, g, wt, eps: float = 1e-6) -> jax.Array:
    """x: [M, D], g: [D], wt: [D, N] -> rmsnorm(x, g) @ wt  (f32 [M, N])."""
    M, D = x.shape
    D2, N = wt.shape
    assert D == D2
    bm = _tile(M, 512, 8)
    bn = _tile(N, 512, 128)
    return pl.pallas_call(
        functools.partial(_rmsnorm_matmul_kernel, eps=eps),
        out_shape=jax.ShapeDtypeStruct((M, N), jnp.float32),
        grid_spec=pltpu.PrefetchScalarGridSpec(
            num_scalar_prefetch=0,
            grid=(M // bm, N // bn),
            in_specs=[
                pl.BlockSpec((bm, D), lambda i, j: (i, 0)),
                pl.BlockSpec((1, D), lambda i, j: (0, 0)),
                pl.BlockSpec((D, bn), lambda i, j: (0, j)),
            ],
            out_specs=pl.BlockSpec((bm, bn), lambda i, j: (i, j)),
        ),
        compiler_params=pltpu.CompilerParams(
            dimension_semantics=("parallel", "parallel")),
    )(x, g.reshape(1, D), wt)


# ----------------------------------------------------------------------------
# Pallas kernel 3: standalone RMSNorm (row-wise)
# ----------------------------------------------------------------------------
def _rmsnorm_kernel(x_ref, w_ref, o_ref, *, eps: float):
    x = x_ref[...]
    ms = jnp.mean(x * x, axis=-1, keepdims=True)
    o_ref[...] = (x * jax.lax.rsqrt(ms + eps)) * w_ref[...]


def rmsnorm(x: jax.Array, w: jax.Array, eps: float = 1e-6) -> jax.Array:
    N, D = x.shape
    tm = _tile(N, 512, 8)
    return pl.pallas_call(
        functools.partial(_rmsnorm_kernel, eps=eps),
        out_shape=jax.ShapeDtypeStruct((N, D), x.dtype),
        grid_spec=pltpu.PrefetchScalarGridSpec(
            num_scalar_prefetch=0,
            grid=(N // tm,),
            in_specs=[
                pl.BlockSpec((tm, D), lambda i: (i, 0)),
                pl.BlockSpec((1, D), lambda i: (0, 0)),
            ],
            out_specs=pl.BlockSpec((tm, D), lambda i: (i, 0)),
        ),
        compiler_params=pltpu.CompilerParams(dimension_semantics=("parallel",)),
    )(x, w.reshape(1, D))


# ----------------------------------------------------------------------------
# Pallas kernel 4: attention core over blocks of heads, causal mask generated
# in-kernel (no [S,S] HBM mask), softmax denominator via pl.reciprocal.
# TODO(synk): add flash-style KV tiling (online softmax) for long S; at small
#             S the full score block fits comfortably in VMEM.
# ----------------------------------------------------------------------------
def _attn_kernel(q_ref, k_ref, v_ref, o_ref, *, scale: float):
    q = q_ref[...]                                   # (Hb, S, Dh)
    k = k_ref[...]
    v = v_ref[...]
    s = jnp.einsum('bqd,bkd->bqk', q, k,
                   preferred_element_type=jnp.float32) * scale
    qi = jax.lax.broadcasted_iota(jnp.int32, s.shape, 1)
    ki = jax.lax.broadcasted_iota(jnp.int32, s.shape, 2)
    s = jnp.where(ki <= qi, s, -1e30)                # causal mask, in-kernel
    m = jnp.max(s, axis=-1, keepdims=True)
    e = jnp.exp(s - m)
    denom = jnp.sum(e, axis=-1, keepdims=True)
    p = e * pl.reciprocal(denom, approx=True)
    o = jnp.einsum('bqk,bkd->bqd', p.astype(v.dtype), v,
                   preferred_element_type=jnp.float32)
    o_ref[...] = o.astype(o_ref.dtype)


def attention_core(q, k, v, scale: float) -> jax.Array:
    """q,k,v: [B*H, S, Dh] (causal attention) -> [B*H, S, Dh]."""
    BH, S, Dh = q.shape
    # block several heads per grid step; bound the score block's VMEM use
    hb_pref = max(1, min(8, (2 * 1024 * 1024) // max(1, S * S * 4)))
    hb = _tile(BH, hb_pref, 1)
    return pl.pallas_call(
        functools.partial(_attn_kernel, scale=scale),
        out_shape=jax.ShapeDtypeStruct((BH, S, Dh), q.dtype),
        grid_spec=pltpu.PrefetchScalarGridSpec(
            num_scalar_prefetch=0,
            grid=(BH // hb,),
            in_specs=[
                pl.BlockSpec((hb, S, Dh), lambda i: (i, 0, 0)),
                pl.BlockSpec((hb, S, Dh), lambda i: (i, 0, 0)),
                pl.BlockSpec((hb, S, Dh), lambda i: (i, 0, 0)),
            ],
            out_specs=pl.BlockSpec((hb, S, Dh), lambda i: (i, 0, 0)),
        ),
        compiler_params=pltpu.CompilerParams(dimension_semantics=("parallel",)),
    )(q, k, v)


# ----------------------------------------------------------------------------
# Pallas kernel 5: all-experts MoE FFN in ONE pallas_call.
#   grid = (token blocks, experts); output block resident across the expert
#   axis, accumulating  sum_e cw[e] * SwiGLU_e(x).
#   W1 is pre-split into W1a/W1b -> no lane-crossing h[:, :dff] slice.
# TODO(synk): true sparse dispatch (sorted-by-expert tokens + scalar-prefetch
#             group offsets) would skip unrouted tokens; here routed experts
#             run densely and unrouted tokens get zero combine weight
#             (identical math to the PyTorch gather/scatter).
# TODO(synk): tile the hidden dim (d_ff) / D for production sizes on v7x
#             (64 MiB VMEM) instead of keeping full expert weights resident.
# ----------------------------------------------------------------------------
def _moe_kernel(x_ref, cw_ref, w1a_ref, w1b_ref, w2_ref, o_ref):
    @pl.when(pl.program_id(1) == 0)
    def _():
        o_ref[...] = jnp.zeros_like(o_ref)

    x = x_ref[...]
    h1 = jnp.dot(x, w1a_ref[0], preferred_element_type=jnp.float32)
    h2 = jnp.dot(x, w1b_ref[0], preferred_element_type=jnp.float32)
    act = h1 * (h2 * jax.nn.sigmoid(h2))             # SwiGLU: x1 * silu(x2)
    y = jnp.dot(act.astype(w2_ref.dtype), w2_ref[0],
                preferred_element_type=jnp.float32)
    o_ref[...] += cw_ref[0] * y                      # cw_ref[0]: (bm, 1)


def moe_experts(x, cw, w1a, w1b, w2) -> jax.Array:
    """x: [N, D], cw: [E, N, 1] combine weights, w1a/w1b: [E, D, dff],
    w2: [E, dff, D]  ->  sum_e cw[e] * FFN_e(x)   (f32 [N, D])."""
    N, D = x.shape
    E, _, dff = w1a.shape
    bm = _tile(N, 512, 8)
    return pl.pallas_call(
        _moe_kernel,
        out_shape=jax.ShapeDtypeStruct((N, D), jnp.float32),
        grid_spec=pltpu.PrefetchScalarGridSpec(
            num_scalar_prefetch=0,
            grid=(N // bm, E),
            in_specs=[
                pl.BlockSpec((bm, D), lambda i, e: (i, 0)),
                pl.BlockSpec((1, bm, 1), lambda i, e: (e, i, 0)),
                pl.BlockSpec((1, D, dff), lambda i, e: (e, 0, 0)),
                pl.BlockSpec((1, D, dff), lambda i, e: (e, 0, 0)),
                pl.BlockSpec((1, dff, D), lambda i, e: (e, 0, 0)),
            ],
            out_specs=pl.BlockSpec((bm, D), lambda i, e: (i, 0)),
        ),
        compiler_params=pltpu.CompilerParams(
            dimension_semantics=("parallel", "arbitrary")),
    )(x, cw, w1a, w1b, w2)


# ----------------------------------------------------------------------------
# plain-JAX reference ops (same signatures) for correctness checks
# ----------------------------------------------------------------------------
def _ref_matmul(x, wt):
    return (x @ wt).astype(jnp.float32)


def _ref_rmsnorm(x, w, eps=1e-6):
    rms = jnp.sqrt(jnp.mean(x * x, axis=-1, keepdims=True) + eps)
    return x / rms * w


def _ref_rmsnorm_matmul(x, g, wt, eps=1e-6):
    return (_ref_rmsnorm(x, g, eps) @ wt).astype(jnp.float32)


def _ref_attention(q, k, v, scale):
    S = q.shape[1]
    s = jnp.einsum('bqd,bkd->bqk', q, k) * scale
    mask = jnp.tril(jnp.ones((S, S), bool))
    s = jnp.where(mask[None], s, -1e30)
    p = jax.nn.softmax(s, axis=-1)
    return jnp.einsum('bqk,bkd->bqd', p, v)


def _ref_moe(x, cw, w1a, w1b, w2):
    out = jnp.zeros_like(x)
    for e in range(w1a.shape[0]):
        h1 = x @ w1a[e]
        h2 = x @ w1b[e]
        out = out + cw[e] * ((h1 * jax.nn.silu(h2)) @ w2[e])
    return out


PALLAS_OPS = dict(matmul=matmul, rmsnorm=rmsnorm, rmsnorm_matmul=rmsnorm_matmul,
                  attention=attention_core, moe=moe_experts)
REF_OPS = dict(matmul=_ref_matmul, rmsnorm=_ref_rmsnorm,
               rmsnorm_matmul=_ref_rmsnorm_matmul,
               attention=_ref_attention, moe=_ref_moe)


# ----------------------------------------------------------------------------
# model glue (RoPE, routing, reshapes) — faithful to the PyTorch forward
# ----------------------------------------------------------------------------
def rotate_half(x):
    h = x.shape[-1] // 2
    return jnp.concatenate([-x[..., h:], x[..., :h]], axis=-1)


def build_rotary(rot_dim: int, seq_len: int):
    inv_freq = 1.0 / (10000.0 ** (jnp.arange(0, rot_dim, 2, dtype=jnp.float32)
                                  / rot_dim))
    t = jnp.arange(seq_len, dtype=jnp.float32)
    freqs = jnp.einsum('i,j->ij', t, inv_freq)
    emb = jnp.concatenate([freqs, freqs], axis=-1)            # [S, rot]
    # layout [1, S, 1, rot] so RoPE applies directly in [B, S, H, rot]
    return jnp.cos(emb)[None, :, None, :], jnp.sin(emb)[None, :, None, :]


def mla_attention(x, p, cos, sin, cfg, ops):
    """x is the residual-stream input; sublayer-0 RMSNorm is fused into the
    latent-projection matmul."""
    B, S, D = x.shape
    H, hd = cfg['num_heads'], cfg['head_dim']
    rot, cont = cfg['rot_dim'], cfg['cont_dim']
    Lq = cfg['latent_q']
    Hr = H * rot

    xf = x.reshape(B * S, D)
    z = ops['rmsnorm_matmul'](xf, p['norm0'], p['w_lat'])     # [BS, Lq+Lkv]
    zq, zkv = z[:, :Lq], z[:, Lq:]

    qp = ops['matmul'](zq, p['w_qproj'])                      # [BS, H*rot + D]
    kvp = ops['matmul'](zkv, p['w_kvproj'])                   # [BS, H*rot + 2D]

    q_rot = qp[:, :Hr].reshape(B, S, H, rot)
    q_cont = qp[:, Hr:].reshape(B, S, H, hd)
    k_rot = kvp[:, :Hr].reshape(B, S, H, rot)
    k_cont = kvp[:, Hr:Hr + D].reshape(B, S, H, hd)
    v = kvp[:, Hr + D:].reshape(B, S, H, hd)

    q_r = q_rot * cos + rotate_half(q_rot) * sin              # RoPE in [B,S,H,rot]
    k_r = k_rot * cos + rotate_half(k_rot) * sin

    q = jnp.concatenate([q_cont[..., :cont], q_r], axis=-1)   # [B,S,H,hd]
    k = jnp.concatenate([k_cont[..., :cont], k_r], axis=-1)

    qh = q.transpose(0, 2, 1, 3).reshape(B * H, S, hd)
    kh = k.transpose(0, 2, 1, 3).reshape(B * H, S, hd)
    vh = v.transpose(0, 2, 1, 3).reshape(B * H, S, hd)

    o = ops['attention'](qh, kh, vh, 1.0 / math.sqrt(hd))
    o = o.reshape(B, H, S, hd).transpose(0, 2, 1, 3).reshape(B * S, D)
    return ops['matmul'](o, p['wout']).reshape(B, S, D)


def _routing_mask(aff, top_k: int, capacity: int):
    """Top-k expert selection + per-expert capacity truncation (by affinity)."""
    N, R = aff.shape
    _, topi = jax.lax.top_k(aff, top_k)
    sel = jnp.zeros((N, R), dtype=bool)
    sel = sel.at[jnp.arange(N)[:, None], topi].set(True)
    score = jnp.where(sel, aff, -jnp.inf)
    rank = jnp.argsort(jnp.argsort(-score, axis=0), axis=0)
    return sel & (rank < capacity)


def moe_ff(xf, p, cfg, ops, routing_mask=None):
    N, D = xf.shape
    R, ns = cfg['num_routed'], cfg['num_shared']
    capacity = max(1, int(cfg['capacity_factor'] * N / R))

    # gate: lane-dense padded matmul, slice the R real columns outside
    logits = ops['matmul'](xf, p['wgate_pad'])[:, :R] + p['expert_bias'][None, :]
    aff = jax.nn.sigmoid(logits)
    if routing_mask is None:
        routing_mask = _routing_mask(aff, cfg['top_k'], capacity)
    routed_w = jnp.where(routing_mask, aff, 0.0)               # [N, R]
    shared_w = jnp.ones((N, ns), dtype=xf.dtype)               # shared weight 1
    cw = jnp.concatenate([shared_w, routed_w], axis=1).T[:, :, None]  # [E, N, 1]

    out = ops['moe'](xf, cw, p['w1a'], p['w1b'], p['w2'])
    return out, routing_mask


def decoder_block_moe(x, p, cos, sin, cfg, ops, routing_mask=None):
    B, S, D = x.shape
    # sublayer 0: x + attn(RMSNorm(x))      (dropout = identity in eval mode)
    attn_out = x + mla_attention(x, p, cos, sin, cfg, ops)
    # sublayer 1: attn_out + MoE_FF(RMSNorm(attn_out))
    xn1 = ops['rmsnorm'](attn_out.reshape(-1, D), p['norm1'])
    moe, routing_mask = moe_ff(xn1, p, cfg, ops, routing_mask)
    return attn_out + moe.reshape(B, S, D), routing_mask


# ----------------------------------------------------------------------------
# parameter init (weights stored transposed: [in, out]) + fusion prep
# ----------------------------------------------------------------------------
def init_params(key, cfg):
    D, H, rot = cfg['dim'], cfg['num_heads'], cfg['rot_dim']
    dff, E, R = cfg['d_ff'], cfg['num_experts'], cfg['num_routed']
    Lq, Lkv = cfg['latent_q'], cfg['latent_kv']
    keys = jax.random.split(key, 10 + 2 * E)

    def lin(k, fan_in, fan_out):
        return (jax.random.normal(k, (fan_in, fan_out), jnp.float32)
                / jnp.sqrt(float(fan_in)))

    return {
        'norm0': jnp.ones((D,), jnp.float32),
        'norm1': jnp.ones((D,), jnp.float32),
        'wlq': lin(keys[0], D, Lq),
        'wlkv': lin(keys[1], D, Lkv),
        'wrq': lin(keys[2], Lq, H * rot * 2),
        'wrk': lin(keys[3], Lkv, H * rot * 2),
        'wqup': lin(keys[4], Lq, D),
        'wkup': lin(keys[5], Lkv, D),
        'wvup': lin(keys[6], Lkv, D),
        'wout': lin(keys[7], D, D),
        'wgate': lin(keys[8], D, R),
        'expert_bias': 0.1 * jax.random.normal(keys[9], (R,), jnp.float32),
        'w1t': [lin(keys[10 + 2 * e], D, 2 * dff) for e in range(E)],
        'w2t': [lin(keys[11 + 2 * e], dff, D) for e in range(E)],
    }


def prepare_fused(p, cfg):
    """Build the fused / stacked weight layouts consumed by the kernels.
    NOTE: weights could be stored bf16 here (MXU-native, halves HBM traffic);
    kept f32 in this demo for exact comparison against the f32 reference."""
    D, H, rot, dff = cfg['dim'], cfg['num_heads'], cfg['rot_dim'], cfg['d_ff']
    Lq, Lkv, R = cfg['latent_q'], cfg['latent_kv'], cfg['num_routed']

    # only the used ([..., :rot]) half of the rotary projection is computed
    wrq_used = p['wrq'].reshape(Lq, H, 2 * rot)[:, :, :rot].reshape(Lq, H * rot)
    wrk_used = p['wrk'].reshape(Lkv, H, 2 * rot)[:, :, :rot].reshape(Lkv, H * rot)

    fused = dict(p)
    fused['w_lat'] = jnp.concatenate([p['wlq'], p['wlkv']], axis=1)
    fused['w_qproj'] = jnp.concatenate([wrq_used, p['wqup']], axis=1)
    fused['w_kvproj'] = jnp.concatenate([wrk_used, p['wkup'], p['wvup']], axis=1)

    gp = max(128, ((R + 127) // 128) * 128)                    # lane-dense gate
    fused['wgate_pad'] = jnp.zeros((D, gp), jnp.float32).at[:, :R].set(p['wgate'])

    w1 = jnp.stack(p['w1t'])                                   # [E, D, 2*dff]
    fused['w1a'] = w1[:, :, :dff]                              # x1 branch
    fused['w1b'] = w1[:, :, dff:]                              # x2 (silu) branch
    fused['w2'] = jnp.stack(p['w2t'])                          # [E, dff, D]
    return fused


def _chk(got, want, name, atol=2e-2, rtol=2e-2):
    assert got.shape == want.shape, f"{name}: shape {got.shape} vs {want.shape}"
    err = float(jnp.max(jnp.abs(got - want)))
    assert jnp.allclose(got, want, atol=atol, rtol=rtol), \
        f"{name} mismatch vs reference (max abs diff {err})"


# ----------------------------------------------------------------------------
if __name__ == "__main__":
    # small shapes consistent with DecoderBlockMoE
    B, S = 2, 8
    cfg = dict(dim=32, num_heads=4, d_ff=32, num_experts=4, top_k=2,
               num_shared=1, capacity_factor=1.0)
    D, H = cfg['dim'], cfg['num_heads']
    head_dim = D // H
    cfg.update(head_dim=head_dim, rot_dim=head_dim // 2,
               cont_dim=head_dim - head_dim // 2,
               num_routed=cfg['num_experts'] - cfg['num_shared'],
               latent_q=D // 2, latent_kv=D // 4)

    key = jax.random.PRNGKey(0)
    kx, kp, kq, kk, kv, kw = jax.random.split(key, 6)
    x = jax.random.normal(kx, (B, S, D), jnp.float32)
    raw = init_params(kp, cfg)
    params = prepare_fused(raw, cfg)

    cos, sin = build_rotary(cfg['rot_dim'], S)

    # ---- per-kernel unit checks vs plain-JAX references ----
    xf = x.reshape(B * S, D)
    _chk(matmul(xf, params['w_lat']), _ref_matmul(xf, params['w_lat']),
         "matmul")
    _chk(rmsnorm(xf, params['norm1']), _ref_rmsnorm(xf, params['norm1']),
         "rmsnorm")
    _chk(rmsnorm_matmul(xf, params['norm0'], params['w_lat']),
         _ref_rmsnorm_matmul(xf, params['norm0'], params['w_lat']),
         "rmsnorm_matmul")
    qt = jax.random.normal(kq, (B * H, S, head_dim), jnp.float32)
    kt = jax.random.normal(kk, (B * H, S, head_dim), jnp.float32)
    vt = jax.random.normal(kv, (B * H, S, head_dim), jnp.float32)
    sc = 1.0 / math.sqrt(head_dim)
    _chk(attention_core(qt, kt, vt, sc), _ref_attention(qt, kt, vt, sc),
         "attention")
    cw_test = jax.random.uniform(kw, (cfg['num_experts'], B * S, 1), jnp.float32)
    _chk(moe_experts(xf, cw_test, params['w1a'], params['w1b'], params['w2']),
         _ref_moe(xf, cw_test, params['w1a'], params['w1b'], params['w2']),
         "moe_experts")

    # ---- full DecoderBlockMoE forward (Pallas kernels) ----
    out, rmask = decoder_block_moe(x, params, cos, sin, cfg, PALLAS_OPS)
    jax.block_until_ready(out)

    # end-to-end reference: plain-JAX math; reuse the Pallas path's discrete
    # routing mask so near-tied top-k choices (which can legitimately flip
    # under tiny MXU-vs-XLA rounding differences) don't dominate the compare.
    out_ref, _ = decoder_block_moe(x, params, cos, sin, cfg, REF_OPS,
                                   routing_mask=rmask)
    assert out.shape == (B, S, D)
    assert bool(jnp.all(jnp.isfinite(out)))
    assert jnp.allclose(out, out_ref, atol=5e-2, rtol=5e-2), \
        "decoder block output mismatch vs reference"

    print("KERNEL_OK")
</pallas_src>

<mosaic_0001>
module attributes {stable_mosaic.version = 11 : i64} {
  func.func @_matmul_kernel(%arg0: i32, %arg1: i32, %arg2: i32, %arg3: memref<16x32xf32, #tpu.memory_space<vmem>>, %arg4: memref<32x24xf32, #tpu.memory_space<vmem>>, %arg5: memref<16x24xf32, #tpu.memory_space<vmem>>) attributes {dimension_semantics = [#tpu.dimension_semantics<parallel>, #tpu.dimension_semantics<parallel>, #tpu.dimension_semantics<arbitrary>], iteration_bounds = array<i64: 1, 1, 1>, scalar_prefetch = 0 : i64, scratch_operands = 0 : i64, tpu.core_type = #tpu.core_type<tc>, window_params = [{transform_indices = @transform_0, window_bounds = array<i64: 16, 32>}, {transform_indices = @transform_1, window_bounds = array<i64: 32, 24>}, {transform_indices = @transform_2, window_bounds = array<i64: 16, 24>}]} {
    %c0_i32 = arith.constant 0 : i32
    %0 = arith.cmpi eq, %arg2, %c0_i32 : i32
    %1 = arith.extui %0 : i1 to i32
    %c0_i32_0 = arith.constant 0 : i32
    %2 = arith.cmpi ne, %1, %c0_i32_0 : i32
    scf.if %2 {
      %cst_8 = arith.constant 0.000000e+00 : f32
      %9 = vector.broadcast %cst_8 : f32 to vector<16x24xf32>
      %c0_9 = arith.constant 0 : index
      %c0_10 = arith.constant 0 : index
      %10 = vector.load %arg5[%c0_9, %c0_10] : memref<16x24xf32, #tpu.memory_space<vmem>>, vector<16x24xf32>
      tpu.vector_store %arg5[%c0_9, %c0_10], %9 {strides = array<i32>} : memref<16x24xf32, #tpu.memory_space<vmem>>, vector<16x24xf32>,
    } else {
    }
    %c0 = arith.constant 0 : index
    %c0_1 = arith.constant 0 : index
    %3 = vector.load %arg5[%c0, %c0_1] : memref<16x24xf32, #tpu.memory_space<vmem>>, vector<16x24xf32>
    %c0_2 = arith.constant 0 : index
    %c0_3 = arith.constant 0 : index
    %4 = vector.load %arg3[%c0_2, %c0_3] : memref<16x32xf32, #tpu.memory_space<vmem>>, vector<16x32xf32>
    %c0_4 = arith.constant 0 : index
    %c0_5 = arith.constant 0 : index
    %5 = vector.load %arg4[%c0_4, %c0_5] : memref<32x24xf32, #tpu.memory_space<vmem>>, vector<32x24xf32>
    %cst = arith.constant dense<0.000000e+00> : vector<16x24xf32>
    %6 = tpu.matmul %4, %5, %cst {dimension_numbers = #tpu.dot_dimension_numbers<[1], [0], [0], [1], [0, 0, 1, 1], [], []>} : vector<16x32xf32>, vector<32x24xf32>, vector<16x24xf32> -> vector<16x24xf32>
    %7 = arith.addf %3, %6 : vector<16x24xf32>
    %c0_6 = arith.constant 0 : index
    %c0_7 = arith.constant 0 : index
    %8 = vector.load %arg5[%c0_6, %c0_7] : memref<16x24xf32, #tpu.memory_space<vmem>>, vector<16x24xf32>
    tpu.vector_store %arg5[%c0_6, %c0_7], %7 {strides = array<i32>} : memref<16x24xf32, #tpu.memory_space<vmem>>, vector<16x24xf32>,
    return
  }
  func.func @transform_0(%arg0: i32, %arg1: i32, %arg2: i32) -> (i32, i32) {
    %c0_i32 = arith.constant 0 : i32
    return %arg0, %arg2 : i32, i32
  }
  func.func @transform_1(%arg0: i32, %arg1: i32, %arg2: i32) -> (i32, i32) {
    %c0_i32 = arith.constant 0 : i32
    return %arg2, %arg1 : i32, i32
  }
  func.func @transform_2(%arg0: i32, %arg1: i32, %arg2: i32) -> (i32, i32) {
    %c0_i32 = arith.constant 0 : i32
    return %arg0, %arg1 : i32, i32
  }
}

</mosaic_0001>

<llo_original>
// kernel: tpu_custom_call.1
$region0: #{tpu_custom_call.1}
  #allocation0 [shape = 'u32[]', space=smem, size = 0x4, offset = 0x4, fixed_abs, tag = 'smem constant byte address 0x4 - core index']
  #allocation1 [shape = 'u32[72,128]{1,0:T(1,128)}', space=vmem, size = 0x9000, scoped, tag = 'internal scratch']
  %s0 = inlined_call_operand.vmem [shape: f32[16,32], index: 0, kind: input, shape index: {}]
  %s1 = inlined_call_operand.vmem [shape: f32[32,24], index: 1, kind: input, shape index: {}]
  %s2 = inlined_call_operand.hbm [shape: f32[16,24], index: 2, kind: output, shape index: {}]
  %s3 = sld [smem:[#allocation0]]
  $region22: #{tpu_custom_call.1} parent=0
    _
  %s5 = ssub.s32 1, %s3
  %s6 = scalar_select 0, %s5, %s3
  $region1: #{tpu_custom_call.1} parent=0
    #allocation2 [shape = 'u8[8192]{0}', space=vmem, size = 0x2000, scoped, tag = 'output window, operand 0, single buffered']
    #allocation3 [shape = 's32[1]{0}', space=sflag, size = 0x4, scoped, tag = 'scoped memory for tpu_custom_call.1']
    %7 = vsyncpa [#allocation3], 0
    // Predicated region
    $region2: #{tpu_custom_call.1} parent=1 // pred_check
      _
    $region3: #{tpu_custom_call.1} parent=1 // pred_check_branch
      %9 = sbr.rel (0) target = $region5
    $region4: #{tpu_custom_call.1} parent=1 // pred_region
      _
    $region5: #{tpu_custom_call.1} parent=1 // pred_fallthru
      _
    // Predicated region
    $region6: #{tpu_custom_call.1} parent=1 // pred_check
      _
    $region7: #{tpu_custom_call.1} parent=1 // pred_check_branch
      %11 = sbr.rel (0) target = $region9
    $region8: #{tpu_custom_call.1} parent=1 // pred_region
      _
    $region9: #{tpu_custom_call.1} parent=1 // pred_fallthru
      _
    %p12 = scmp.eq.s32.totalorder 0, 0
    // Predicated region
    $region10: #{tpu_custom_call.1} parent=1 // pred_check
      %p13 = pneg %p12
    $region11: #{tpu_custom_call.1} parent=1 // pred_check_branch
      %15 = sbr.rel (%p13) target = $region13
    $region12: #{tpu_custom_call.1} parent=1 // pred_region
      %vm16 = vcmask 195584
      %17 = vst.msk [vmem:[#allocation2] sm:$0xff] %vm16, 0.0
      %18 = vst.msk [vmem:[#allocation2 + $0x8] sm:$0xff] %vm16, 0.0
    $region13: #{tpu_custom_call.1} parent=1 // pred_fallthru
      _
    %v19 = vld [vmem:[#allocation2] sm:$0xff]
    %v20 = vld [vmem:[#allocation2 + $0x8] sm:$0xff]
    %v21 = vld [vmem:[%s0] sm:$0xff]
    %v22 = vld [vmem:[%s0 + $0x8] sm:$0xff]
    %v23 = vld [vmem:[%s1] sm:$0xff]
    %v24 = vld [vmem:[%s1 + $0x8] sm:$0xff]
    %v25 = vld [vmem:[%s1 + $0x10] sm:$0xff]
    %v26 = vld [vmem:[%s1 + $0x18] sm:$0xff]
    %vm27 = vcmask 261120
    %v29 = vsel %vm27, %v21, 0
    %v32 = vsel %vm27, %v22, 0
    %34 = vmatpush.msra.mxu0 0.0
    %35 = vmatpush.msra.mxu0 0.0
    %36 = vmatpush.msra.mxu0 0.0
    %37 = vmatpush.msra.mxu0 0.0
    %38 = vmatpush.msra.mxu0 0.0
    %39 = vmatpush.msra.mxu0 0.0
    %40 = vmatpush.msra.mxu0 0.0
    %41 = vmatpush.msra.mxu0 0.0
    %42 = vmatpush.msra.mxu0 0.0
    %43 = vmatpush.msra.mxu0 0.0
    %44 = vmatpush.msra.mxu0 0.0
    %45 = vmatpush.msra.mxu0 0.0
    %46 = vmatpush.msra.mxu0 %v26
    %47 = vmatpush.msra.mxu0 %v25
    %48 = vmatpush.msra.mxu0 %v24
    %49 = vmatpush.msra.mxu0 %v23
    %50 = vmatmul.f32.gmra.mxu0 %v29
    %v51 = vpop.f32.mrf.mxu0
    %v52 = vadd.f32 0.0, %v51
    %53 = vmatmul.f32.gmra.mxu0 %v32
    %v54 = vpop.f32.mrf.mxu0
    %v55 = vadd.f32 0.0, %v54
    %56 = vdwg.mxu0
    %v57 = vadd.f32 %v19, %v52
    %v58 = vadd.f32 %v20, %v55
    %vm59 = vcmask 195584
    %60 = vst.msk [vmem:[#allocation2] sm:$0xff] %vm59, %v57
    %61 = vst.msk [vmem:[#allocation2 + $0x8] sm:$0xff] %vm59, %v58
    // Predicated region
    $region14: #{tpu_custom_call.1} parent=1 // pred_check
      _
    $region15: #{tpu_custom_call.1} parent=1 // pred_check_branch
      %63 = sbr.rel (0) target = $region17
    $region16: #{tpu_custom_call.1} parent=1 // pred_region
      %65 = vsyncadd [#allocation3], 0
      %s66 = sshll.u32 [#allocation2], 4
      %s67 = int_to_ptr.vmem [resolvable:$true] %s66
      %s68 = sshll.u32 %s2, 4
      %s69 = int_to_ptr.hbm [resolvable:$true] %s68
      %74 = dma.vmem_to_hbm [thread:$0]  %s67, 256, %s69, [#allocation3], 128, 128, 8
    $region17: #{tpu_custom_call.1} parent=1 // pred_fallthru
      _
    // Predicated region
    $region18: #{tpu_custom_call.1} parent=1 // pred_check
      _
    $region19: #{tpu_custom_call.1} parent=1 // pred_check_branch
      %76 = sbr.rel (0) target = $region21
    $region20: #{tpu_custom_call.1} parent=1 // pred_region
      %78 = dma.done [#allocation3], 256
    $region21: #{tpu_custom_call.1} parent=1 // pred_fallthru
      _
    %79 = vsyncpa [#allocation3], 1

</llo_original>
